<compile_context>
chip_gen: v5e
topology: v5e:2x2
jax: 0.10.0
libtpu: 0.0.40
codegen_flags: <defaults>
</compile_context>

<pallas_src>
import functools

import jax
import jax.numpy as jnp
from jax.experimental import pallas as pl
from jax.experimental.pallas import tpu as pltpu


# ---------------------------------------------------------------------------
# Kernels (one row-tile [TR, C] per grid step)
# ---------------------------------------------------------------------------

def _silu_kernel(x_ref, o_ref):
    x = x_ref[...].astype(jnp.float32)
    # SiLU / swish: x * sigmoid(x).  exp lowers to the EUP (free slot vs VPU).
    y = x * (1.0 / (1.0 + jnp.exp(-x)))
    o_ref[...] = y.astype(o_ref.dtype)


def _relu_kernel(x_ref, o_ref):
    x = x_ref[...]
    o_ref[...] = jnp.maximum(x, jnp.zeros_like(x))


def _softmax_kernel(x_ref, o_ref):
    # Numerically stable softmax over the last (lane) axis, per row.
    x = x_ref[...].astype(jnp.float32)
    m = jnp.max(x, axis=-1, keepdims=True)
    e = jnp.exp(x - m)
    s = jnp.sum(e, axis=-1, keepdims=True)
    o_ref[...] = (e * pl.reciprocal(s, approx=False)).astype(o_ref.dtype)


# ---------------------------------------------------------------------------
# Tiling helpers
# ---------------------------------------------------------------------------

_TARGET_BLOCK_BYTES = 2 * 1024 * 1024  # ~2 MiB per input block
_SMALL_SINGLE_BLOCK_ELEMS = 256 * 1024  # <=1 MiB f32: run as one full block


def _sublane_multiple(dtype):
    # Minimum sublane tile: 8 for f32, 16 for bf16/f16, 32 for int8/fp8.
    return max(8, 32 // jnp.dtype(dtype).itemsize)


def _run_rowwise(kernel, x2, out_dtype):
    """Run `kernel` over a 2D array [R, C], tiling rows in large chunks."""
    r, c = x2.shape
    itemsize = jnp.dtype(x2.dtype).itemsize
    sub = _sublane_multiple(x2.dtype)

    if r <= sub:
        tr = r  # block dim equal to the full array dim is always allowed
    else:
        tr = max(sub, min(r, _TARGET_BLOCK_BYTES // max(1, c * itemsize)))
        tr = max(sub, (tr // sub) * sub)  # sublane-aligned

    grid = (pl.cdiv(r, tr),)  # ragged last block: Pallas masks at the edge

    return pl.pallas_call(
        kernel,
        out_shape=jax.ShapeDtypeStruct((r, c), out_dtype),
        grid_spec=pltpu.PrefetchScalarGridSpec(
            num_scalar_prefetch=0,
            grid=grid,
            in_specs=[pl.BlockSpec((tr, c), lambda i: (i, 0))],
            out_specs=pl.BlockSpec((tr, c), lambda i: (i, 0)),
        ),
        compiler_params=pltpu.CompilerParams(
            dimension_semantics=("parallel",),
        ),
    )(x2)


# ---------------------------------------------------------------------------
# Wrapper
# ---------------------------------------------------------------------------

@functools.partial(jax.jit, static_argnames=("activation_name",))
def activation_forward(x, activation_name="swish"):
    """Pallas equivalent of Activation(activation_name)(x)."""
    orig_shape = x.shape
    dtype = x.dtype

    if activation_name == "softmax":
        # Reduction axis = original last axis; keep it whole on the lane axis.
        c = orig_shape[-1] if len(orig_shape) > 0 else 1
        r = 1
        for d in orig_shape[:-1]:
            r *= d
        x2 = x.reshape(r, c)
        out2 = _run_rowwise(_softmax_kernel, x2, dtype)
        return out2.reshape(orig_shape)

    kernel = _silu_kernel if activation_name == "swish" else _relu_kernel

    # Elementwise: flatten and present a lane-dense 2D view (last dim a
    # multiple of 128) regardless of the original last-axis size.
    total = 1
    for d in orig_shape:
        total *= d

    lane = None
    for cand in (2048, 1024, 512, 256, 128):
        if total % cand == 0:
            lane = cand
            break

    if lane is not None:
        x2 = x.reshape(total // lane, lane)
        out2 = _run_rowwise(kernel, x2, dtype)
        return out2.reshape(orig_shape)

    # Ragged flattened size (not a multiple of 128).
    if total <= _SMALL_SINGLE_BLOCK_ELEMS:
        # Small: a single block whose shape equals the full array dims is
        # always legal -- no padding, no extra HBM passes.
        x2 = x.reshape(1, total)
        out2 = _run_rowwise(kernel, x2, dtype)
        return out2.reshape(orig_shape)

    # Rare large ragged total: tiny tail pad on the flat view only.
    lane = 128
    pad = (-total) % lane
    flat = jnp.pad(x.reshape(-1), (0, pad))
    out2 = _run_rowwise(kernel, flat.reshape(-1, lane), dtype)
    return out2.reshape(-1)[:total].reshape(orig_shape)


# ---------------------------------------------------------------------------
# Test / demo
# ---------------------------------------------------------------------------

def _ref_activation(x, name):
    if name == "swish":
        return x * jax.nn.sigmoid(x)
    if name == "softmax":
        return jax.nn.softmax(x, axis=-1)
    return jnp.maximum(x, 0.0)


if __name__ == "__main__":
    key = jax.random.PRNGKey(0)
    k1, k2, k3 = jax.random.split(key, 3)

    # NCHW input, matching the PyTorch convention of the surrounding model.
    x_main = jax.random.normal(k1, (2, 4, 16, 16), dtype=jnp.float32)
    # Odd shape to exercise ragged-edge handling.
    x_odd = jax.random.normal(k2, (3, 5, 7), dtype=jnp.float32)
    # Attention-like shape with a lane-wide softmax axis.
    x_attn = jax.random.normal(k3, (2, 8, 256), dtype=jnp.float32)

    ok = True
    for x in (x_main, x_odd, x_attn):
        for name in ("swish", "softmax", "relu"):
            y = activation_forward(x, activation_name=name)
            jax.block_until_ready(y)
            y_ref = _ref_activation(x, name)
            if not jnp.allclose(y, y_ref, atol=1e-5, rtol=1e-5):
                ok = False
                print(f"MISMATCH for activation '{name}' on shape {x.shape}")

    if ok:
        print("KERNEL_OK")
</pallas_src>

<mosaic_0001>
module attributes {stable_mosaic.version = 11 : i64} {
  func.func @_silu_kernel(%arg0: i32, %arg1: memref<1x2048xf32, #tpu.memory_space<vmem>>, %arg2: memref<1x2048xf32, #tpu.memory_space<vmem>>) attributes {dimension_semantics = [#tpu.dimension_semantics<parallel>], iteration_bounds = array<i64: 1>, scalar_prefetch = 0 : i64, scratch_operands = 0 : i64, tpu.core_type = #tpu.core_type<tc>, window_params = [{transform_indices = @transform_0, window_bounds = array<i64: 1, 2048>}, {transform_indices = @transform_1, window_bounds = array<i64: 1, 2048>}]} {
    %c0 = arith.constant 0 : index
    %c0_0 = arith.constant 0 : index
    %0 = vector.load %arg1[%c0, %c0_0] : memref<1x2048xf32, #tpu.memory_space<vmem>>, vector<1x2048xf32>
    %cst = arith.constant 0.000000e+00 : f32
    %1 = vector.broadcast %cst : f32 to vector<1x2048xf32>
    %2 = arith.subf %1, %0 : vector<1x2048xf32>
    %3 = math.exp %2 : vector<1x2048xf32>
    %cst_1 = arith.constant 1.000000e+00 : f32
    %4 = vector.broadcast %cst_1 : f32 to vector<1x2048xf32>
    %5 = arith.addf %4, %3 : vector<1x2048xf32>
    %cst_2 = arith.constant 1.000000e+00 : f32
    %6 = vector.broadcast %cst_2 : f32 to vector<1x2048xf32>
    %7 = arith.divf %6, %5 : vector<1x2048xf32>
    %8 = arith.mulf %0, %7 : vector<1x2048xf32>
    %c0_3 = arith.constant 0 : index
    %c0_4 = arith.constant 0 : index
    %9 = vector.load %arg2[%c0_3, %c0_4] : memref<1x2048xf32, #tpu.memory_space<vmem>>, vector<1x2048xf32>
    tpu.vector_store %arg2[%c0_3, %c0_4], %8 {strides = array<i32>} : memref<1x2048xf32, #tpu.memory_space<vmem>>, vector<1x2048xf32>,
    return
  }
  func.func @transform_0(%arg0: i32) -> (i32, i32) {
    %c0_i32 = arith.constant 0 : i32
    %c0_i32_0 = arith.constant 0 : i32
    return %arg0, %c0_i32 : i32, i32
  }
  func.func @transform_1(%arg0: i32) -> (i32, i32) {
    %c0_i32 = arith.constant 0 : i32
    %c0_i32_0 = arith.constant 0 : i32
    return %arg0, %c0_i32 : i32, i32
  }
}

</mosaic_0001>

<llo_original>
// kernel: activation_forward.1
$region0: #{activation_forward.1}
  #allocation0 [shape = 'u32[]', space=smem, size = 0x4, offset = 0x4, fixed_abs, tag = 'smem constant byte address 0x4 - core index']
  #allocation1 [shape = 'u32[72,128]{1,0:T(1,128)}', space=vmem, size = 0x9000, scoped, tag = 'internal scratch']
  %s0 = inlined_call_operand.vmem [shape: f32[1,2048], index: 0, kind: input, shape index: {}]
  %s1 = inlined_call_operand.vmem [shape: f32[1,2048], index: 1, kind: output, shape index: {}]
  %s2 = sld [smem:[#allocation0]]
  $region14: #{activation_forward.1} parent=0
    _
  %s4 = ssub.s32 1, %s2
  %s5 = scalar_select 0, %s4, %s2
  // Predicated region
  $region2: #{activation_forward.1} parent=0 // pred_check
    _
  $region3: #{activation_forward.1} parent=0 // pred_check_branch
    %7 = sbr.rel (0) target = $region5
  $region4: #{activation_forward.1} parent=0 // pred_region
    _
  $region5: #{activation_forward.1} parent=0 // pred_fallthru
    _
  %v8 = vld [vmem:[%s0] sm:$0xff]
  %v9 = vld [vmem:[%s0 + $0x8] sm:$0xff]
  %v10 = vsub.f32 0.0, %v8
  %v11 = vsub.f32 0.0, %v9
  %v12 = vmul.f32 %v10, 1.442695
  %v13 = vpow.pop %v12
  %v14 = vmul.f32 %v11, 1.442695
  %v15 = vpow.pop %v14
  %v16 = vadd.f32 %v13, 1.0
  %v17 = vadd.f32 %v15, 1.0
  %v18 = vrcp.pop %v16
  %v19 = vmul.f32 %v16, %v18
  %v20 = vsub.f32 1.0, %v19
  %v21 = vmul.f32 %v18, %v20
  %v22 = vadd.f32 %v18, %v21
  %vm23 = vweird.f32 %v16
  %vm24 = vweird.f32 %v18
  %vm25 = vmor %vm23, %vm24
  %v26 = vsel %vm25, %v18, %v22
  %v27 = vand.u32 2147483647, %v16
  %vm28 = vcmp.eq.f32.partialorder %v27, 8.507059e+37
  %v29 = vand.u32 %v16, 2147483648
  %v30 = vor.u32 1.1754944e-38, %v29
  %v31 = vsel %vm28, %v30, %v26
  %v32 = vmul.f32 1.0, %v31
  %v33 = vrcp.pop %v17
  %v34 = vmul.f32 %v17, %v33
  %v35 = vsub.f32 1.0, %v34
  %v36 = vmul.f32 %v33, %v35
  %v37 = vadd.f32 %v33, %v36
  %vm38 = vweird.f32 %v17
  %vm39 = vweird.f32 %v33
  %vm40 = vmor %vm38, %vm39
  %v41 = vsel %vm40, %v33, %v37
  %v42 = vand.u32 2147483647, %v17
  %vm43 = vcmp.eq.f32.partialorder %v42, 8.507059e+37
  %v44 = vand.u32 %v17, 2147483648
  %v45 = vor.u32 1.1754944e-38, %v44
  %v46 = vsel %vm43, %v45, %v41
  %v47 = vmul.f32 1.0, %v46
  %v48 = vmul.f32 %v8, %v32
  %v49 = vmul.f32 %v9, %v47
  %50 = vst [vmem:[%s1] sm:$0xff] %v48
  %51 = vst [vmem:[%s1 + $0x8] sm:$0xff] %v49
  // Predicated region
  $region6: #{activation_forward.1} parent=0 // pred_check
    _
  $region7: #{activation_forward.1} parent=0 // pred_check_branch
    %53 = sbr.rel (0) target = $region9
  $region8: #{activation_forward.1} parent=0 // pred_region
    _
  $region9: #{activation_forward.1} parent=0 // pred_fallthru
    _
  // Predicated region
  $region10: #{activation_forward.1} parent=0 // pred_check
    _
  $region11: #{activation_forward.1} parent=0 // pred_check_branch
    %55 = sbr.rel (0) target = $region13
  $region12: #{activation_forward.1} parent=0 // pred_region
    _
  $region13: #{activation_forward.1} parent=0 // pred_fallthru
    _

</llo_original>
